<compile_context>
chip_gen: v5e
topology: v5e:2x2
jax: 0.10.0
libtpu: 0.0.40
codegen_flags: <defaults>
</compile_context>

<pallas_src>
from itertools import product

import jax
import jax.numpy as jnp
import numpy as np
from jax import lax
from jax.experimental import pallas as pl
from jax.experimental.pallas import tpu as pltpu


# ----------------------------------------------------------------------------
# Rule / mask preparation (Python glue mirroring
# binary_prepare_admissible_states_mask, with a Python callable as the rule).
# ----------------------------------------------------------------------------
def binary_prepare_admissible_states_mask(concepts, rule):
    """Enumerate all 2**m binary states and mark the admissible ones.

    Same enumeration order as the torch reference: itertools.product over
    (False, True) per concept, first concept = most-significant bit.
    """
    m = len(concepts)
    size = 2 ** m
    mask = np.ones(size, dtype=bool)
    for i, values in enumerate(product(*((False, True) for _ in range(m)))):
        mask[i] = bool(rule(*values))
    return mask


def prepare_head_params(weight, bias, mask, m):
    """One-time parameter preparation (constant-folded offline).

    Returns:
      w      : (n_valid, F) — Linear weight, kept in its native layout
               (the kernel contracts feature dims directly, no transpose).
      b_col  : (n_valid, 1) — bias as a column (broadcasts over batch lanes).
      marg_t : (m, n_valid) — (placement_matrix @ bit_matrix)^T folded into one
               matrix: marg_t[i, v] = 1 iff concept i is True in valid state v.
               marg_t @ probs^T reproduces the cube-slice-and-sum
               marginalization of the torch forward in a single matmul.
    """
    valid_states = np.nonzero(np.asarray(mask))[0]
    n_valid = valid_states.shape[0]
    marg_t = np.zeros((m, n_valid), dtype=np.float32)
    for r, s in enumerate(valid_states):
        for i in range(m):
            # concept i corresponds to bit (m - 1 - i) of the state index.
            if (int(s) >> (m - 1 - i)) & 1:
                marg_t[i, r] = 1.0
    w = jnp.asarray(weight, dtype=jnp.float32)                    # (n_valid, F)
    b_col = jnp.asarray(bias, dtype=jnp.float32).reshape(n_valid, 1)
    return w, b_col, jnp.asarray(marg_t)


# ----------------------------------------------------------------------------
# Pallas kernel: Linear (transposed / batch-on-lanes) -> stable softmax
# numerators -> marginalization matmul -> exact deferred normalization.
# ----------------------------------------------------------------------------
def as_head_kernel(x_ref, w_ref, b_ref, margt_ref, out_ref):
    x = x_ref[...]                                   # (TB, F)  batch on sublanes
    # logits^T = W @ x^T : (n_valid, TB), batch on lanes (lane-dense).
    # Same NT dot_general pattern as the stock Pallas flash-attention q @ k^T.
    logits_t = lax.dot_general(
        w_ref[...], x,
        dimension_numbers=(((1,), (1,)), ((), ())),   # contract feature dims
        preferred_element_type=jnp.float32,
    ) + b_ref[...]                                    # (n_valid, 1) bias bcast

    # Numerically-stable unnormalized softmax; reductions are over the tiny
    # n_valid (sublane) axis, every lane = one independent batch element.
    mx = jnp.max(logits_t, axis=0, keepdims=True)     # (1, TB)
    e = jnp.exp(logits_t - mx)                        # (n_valid, TB)
    denom = jnp.sum(e, axis=0, keepdims=True)         # (1, TB)

    # Marginal numerators: (m, n_valid) @ (n_valid, TB) -> (m, TB).
    num_t = jnp.dot(margt_ref[...], e, preferred_element_type=jnp.float32)

    # Exact deferred normalization (approx reciprocal was the correctness bug).
    # NOTE: tail columns of a partial last batch block compute on unspecified
    # memory; columns are independent and the masked writeback discards them.
    out_ref[...] = num_t / denom                      # (m, TB) lane-dense store


def _batch_tile(B, *, max_tb=4096):
    """Batch tile: one fat block for small/medium B (block == full dims is
    always layout-legal); for large B, 128-aligned tiles with >= 2 grid steps
    so v7x's two TensorCores both get work."""
    if B <= 1024:
        return B
    tb = min(max_tb, pl.cdiv(B, 2))
    return max(128, (tb // 128) * 128)


def binary_admissible_states_head(x, w, b_col, marg_t):
    """x: (B, F). w: (n_valid, F). b_col: (n_valid, 1). marg_t: (m, n_valid).
    Returns (B, m) f32 = P(concept_i == True); same semantics as the torch
    forward (softmax over valid states -> placement -> cube slice-and-sum)."""
    B, F = x.shape
    n_valid = w.shape[0]
    m = marg_t.shape[0]

    TB = _batch_tile(B)
    grid = (pl.cdiv(B, TB),)

    flops = 2 * B * F * n_valid + 2 * B * n_valid * m + 6 * B * n_valid
    bytes_accessed = (x.size * x.dtype.itemsize
                      + 4 * (n_valid * F + n_valid + m * n_valid + B * m))
    cost = pl.CostEstimate(flops=flops, transcendentals=B * n_valid,
                           bytes_accessed=bytes_accessed)

    out_t = pl.pallas_call(
        as_head_kernel,
        out_shape=jax.ShapeDtypeStruct((m, B), jnp.float32),
        grid_spec=pltpu.PrefetchScalarGridSpec(
            num_scalar_prefetch=0,
            grid=grid,
            in_specs=[
                pl.BlockSpec((TB, F), lambda i: (i, 0)),        # x: tiled on batch
                pl.BlockSpec((n_valid, F), lambda i: (0, 0)),   # weight: resident
                pl.BlockSpec((n_valid, 1), lambda i: (0, 0)),   # bias: resident
                pl.BlockSpec((m, n_valid), lambda i: (0, 0)),   # marg^T: resident
            ],
            out_specs=pl.BlockSpec((m, TB), lambda i: (0, i)),  # lane-dense out
        ),
        compiler_params=pltpu.CompilerParams(
            dimension_semantics=("parallel",)),
        cost_estimate=cost,
    )(x, w, b_col, marg_t)

    # Tiny (m, B) -> (B, m) layout fix-up to keep the module's output layout.
    return out_t.T


# ----------------------------------------------------------------------------
# Pure-JAX reference mirroring the torch forward exactly
# (softmax -> @ placement -> cube slice-and-sum).
# ----------------------------------------------------------------------------
def reference(x, weight, bias, mask, m):
    logits = x @ weight.T + bias
    probs = jax.nn.softmax(logits, axis=1)
    n_total = 2 ** m
    valid = np.nonzero(np.asarray(mask))[0]
    placement = np.zeros((len(valid), n_total), dtype=np.float32)
    placement[np.arange(len(valid)), valid] = 1.0
    total = probs @ jnp.asarray(placement)
    cube = total.reshape((-1,) + (2,) * m)
    outs = []
    for i in range(m):
        sliced = cube[(slice(None),) * (i + 1) + (1,)]
        outs.append(sliced.sum(axis=tuple(range(1, sliced.ndim))))
    return jnp.stack(outs, axis=1)


if __name__ == "__main__":
    # Module configuration: 4 binary concepts, rule = (a | b) & ~(c & d)
    concepts = ["a", "b", "c", "d"]
    m = len(concepts)
    rule = lambda a, b, c, d: (a or b) and not (c and d)

    mask = binary_prepare_admissible_states_mask(concepts, rule)
    n_valid = int(mask.sum())                    # 9 valid of 16 total states

    B, in_features = 8, 32

    key = jax.random.PRNGKey(0)
    kx, kw, kb = jax.random.split(key, 3)
    x = jax.random.normal(kx, (B, in_features), dtype=jnp.float32)
    # torch.nn.Linear default init: U(-1/sqrt(F), 1/sqrt(F)) for weight & bias
    bound = 1.0 / np.sqrt(in_features)
    weight = jax.random.uniform(kw, (n_valid, in_features),
                                minval=-bound, maxval=bound, dtype=jnp.float32)
    bias = jax.random.uniform(kb, (n_valid,),
                              minval=-bound, maxval=bound, dtype=jnp.float32)

    w, b_col, marg_t = prepare_head_params(weight, bias, mask, m)

    out = binary_admissible_states_head(x, w, b_col, marg_t)
    out = jax.block_until_ready(out)

    ref = jax.block_until_ready(reference(x, weight, bias, mask, m))
    # Normalization is now exact; remaining tolerance only covers TPU
    # matmul/exp implementation differences between Mosaic and stock XLA.
    np.testing.assert_allclose(np.asarray(out), np.asarray(ref),
                               rtol=2e-3, atol=2e-4)
    assert out.shape == (B, m)
    print("KERNEL_OK")
</pallas_src>

<mosaic_0001>
module attributes {stable_mosaic.version = 11 : i64} {
  func.func @as_head_kernel(%arg0: i32, %arg1: memref<8x32xf32, #tpu.memory_space<vmem>>, %arg2: memref<9x32xf32, #tpu.memory_space<vmem>>, %arg3: memref<9x1xf32, #tpu.memory_space<vmem>>, %arg4: memref<4x9xf32, #tpu.memory_space<vmem>>, %arg5: memref<4x8xf32, #tpu.memory_space<vmem>>) attributes {dimension_semantics = [#tpu.dimension_semantics<parallel>], iteration_bounds = array<i64: 1>, scalar_prefetch = 0 : i64, scratch_operands = 0 : i64, tpu.core_type = #tpu.core_type<tc>, window_params = [{transform_indices = @transform_0, window_bounds = array<i64: 8, 32>}, {pipeline_mode = #tpu.pipeline_mode<synchronous>, transform_indices = @transform_1, window_bounds = array<i64: 9, 32>}, {pipeline_mode = #tpu.pipeline_mode<synchronous>, transform_indices = @transform_2, window_bounds = array<i64: 9, 1>}, {pipeline_mode = #tpu.pipeline_mode<synchronous>, transform_indices = @transform_3, window_bounds = array<i64: 4, 9>}, {transform_indices = @transform_4, window_bounds = array<i64: 4, 8>}]} {
    %c0 = arith.constant 0 : index
    %c0_0 = arith.constant 0 : index
    %0 = vector.load %arg1[%c0, %c0_0] : memref<8x32xf32, #tpu.memory_space<vmem>>, vector<8x32xf32>
    %c0_1 = arith.constant 0 : index
    %c0_2 = arith.constant 0 : index
    %1 = vector.load %arg2[%c0_1, %c0_2] : memref<9x32xf32, #tpu.memory_space<vmem>>, vector<9x32xf32>
    %cst = arith.constant dense<0.000000e+00> : vector<9x8xf32>
    %2 = tpu.matmul %1, %0, %cst {dimension_numbers = #tpu.dot_dimension_numbers<[1], [1], [0], [0], [0, 0, 1, 0], [], []>} : vector<9x32xf32>, vector<8x32xf32>, vector<9x8xf32> -> vector<9x8xf32>
    %c0_3 = arith.constant 0 : index
    %c0_4 = arith.constant 0 : index
    %3 = vector.load %arg3[%c0_3, %c0_4] : memref<9x1xf32, #tpu.memory_space<vmem>>, vector<9x1xf32>
    %4 = vector.broadcast %3 : vector<9x1xf32> to vector<9x8xf32>
    %5 = arith.addf %2, %4 : vector<9x8xf32>
    %cst_5 = arith.constant dense<0xFF800000> : vector<8xf32>
    %6 = vector.multi_reduction <maximumf>, %5, %cst_5 [0] : vector<9x8xf32> to vector<8xf32>
    %7 = vector.shape_cast %6 : vector<8xf32> to vector<1x8xf32>
    %8 = vector.broadcast %7 : vector<1x8xf32> to vector<9x8xf32>
    %9 = arith.subf %5, %8 : vector<9x8xf32>
    %10 = math.exp %9 : vector<9x8xf32>
    %cst_6 = arith.constant dense<0.000000e+00> : vector<8xf32>
    %11 = vector.multi_reduction <add>, %10, %cst_6 [0] : vector<9x8xf32> to vector<8xf32>
    %12 = vector.shape_cast %11 : vector<8xf32> to vector<1x8xf32>
    %c0_7 = arith.constant 0 : index
    %c0_8 = arith.constant 0 : index
    %13 = vector.load %arg4[%c0_7, %c0_8] : memref<4x9xf32, #tpu.memory_space<vmem>>, vector<4x9xf32>
    %cst_9 = arith.constant dense<0.000000e+00> : vector<4x8xf32>
    %14 = tpu.matmul %13, %10, %cst_9 {dimension_numbers = #tpu.dot_dimension_numbers<[1], [0], [0], [1], [0, 0, 1, 1], [], []>} : vector<4x9xf32>, vector<9x8xf32>, vector<4x8xf32> -> vector<4x8xf32>
    %15 = vector.broadcast %12 : vector<1x8xf32> to vector<4x8xf32>
    %16 = arith.divf %14, %15 : vector<4x8xf32>
    %c0_10 = arith.constant 0 : index
    %c0_11 = arith.constant 0 : index
    %17 = vector.load %arg5[%c0_10, %c0_11] : memref<4x8xf32, #tpu.memory_space<vmem>>, vector<4x8xf32>
    tpu.vector_store %arg5[%c0_10, %c0_11], %16 {strides = array<i32>} : memref<4x8xf32, #tpu.memory_space<vmem>>, vector<4x8xf32>,
    return
  }
  func.func @transform_0(%arg0: i32) -> (i32, i32) {
    %c0_i32 = arith.constant 0 : i32
    %c0_i32_0 = arith.constant 0 : i32
    return %arg0, %c0_i32 : i32, i32
  }
  func.func @transform_1(%arg0: i32) -> (i32, i32) {
    %c0_i32 = arith.constant 0 : i32
    %c0_i32_0 = arith.constant 0 : i32
    %c0_i32_1 = arith.constant 0 : i32
    return %c0_i32, %c0_i32_0 : i32, i32
  }
  func.func @transform_2(%arg0: i32) -> (i32, i32) {
    %c0_i32 = arith.constant 0 : i32
    %c0_i32_0 = arith.constant 0 : i32
    %c0_i32_1 = arith.constant 0 : i32
    return %c0_i32, %c0_i32_0 : i32, i32
  }
  func.func @transform_3(%arg0: i32) -> (i32, i32) {
    %c0_i32 = arith.constant 0 : i32
    %c0_i32_0 = arith.constant 0 : i32
    %c0_i32_1 = arith.constant 0 : i32
    return %c0_i32, %c0_i32_0 : i32, i32
  }
  func.func @transform_4(%arg0: i32) -> (i32, i32) {
    %c0_i32 = arith.constant 0 : i32
    %c0_i32_0 = arith.constant 0 : i32
    return %c0_i32, %arg0 : i32, i32
  }
}

</mosaic_0001>

<llo_original>
// kernel: tpu_custom_call.1
$region0: #{tpu_custom_call.1}
  #allocation0 [shape = 'u32[]', space=smem, size = 0x4, offset = 0x4, fixed_abs, tag = 'smem constant byte address 0x4 - core index']
  #allocation1 [shape = 'u32[72,128]{1,0:T(1,128)}', space=vmem, size = 0x9000, scoped, tag = 'internal scratch']
  %s0 = inlined_call_operand.hbm [shape: f32[8,32], index: 0, kind: input, shape index: {}]
  %s1 = inlined_call_operand.vmem [shape: f32[9,32], index: 1, kind: input, shape index: {}]
  %s2 = inlined_call_operand.vmem [shape: f32[9,1], index: 2, kind: input, shape index: {}]
  %s3 = inlined_call_operand.hbm [shape: f32[4,9], index: 3, kind: input, shape index: {}]
  %s4 = inlined_call_operand.hbm [shape: f32[4,8], index: 4, kind: output, shape index: {}]
  %s5 = sld [smem:[#allocation0]]
  $region34: #{tpu_custom_call.1} parent=0
    _
  %s7 = ssub.s32 1, %s5
  %s8 = scalar_select 0, %s7, %s5
  $region1: #{tpu_custom_call.1} parent=0
    #allocation2 [shape = 'u8[4096]{0}', space=vmem, size = 0x1000, scoped, tag = 'input window, operand 0, single buffered']
    #allocation3 [shape = 's32[1]{0}', space=sflag, size = 0x4, scoped, tag = 'scoped memory for tpu_custom_call.1']
    #allocation4 [shape = 's32[1]{0}', space=sflag, size = 0x4, scoped, tag = 'scoped memory for tpu_custom_call.1']
    #allocation5 [shape = 'u8[2048]{0}', space=vmem, size = 0x800, scoped, tag = 'input window, operand 3, single buffered']
    #allocation6 [shape = 's32[1]{0}', space=sflag, size = 0x4, scoped, tag = 'scoped memory for tpu_custom_call.1']
    #allocation7 [shape = 'u8[2048]{0}', space=vmem, size = 0x800, scoped, tag = 'output window, operand 0, single buffered']
    %9 = vsyncpa [#allocation3], 0
    %10 = vsyncpa [#allocation6], 0
    %11 = vsyncpa [#allocation4], 0
    // Predicated region
    $region2: #{tpu_custom_call.1} parent=1 // pred_check
      _
    $region3: #{tpu_custom_call.1} parent=1 // pred_check_branch
      %13 = sbr.rel (0) target = $region5
    $region4: #{tpu_custom_call.1} parent=1 // pred_region
      %15 = vsyncadd [#allocation3], 0
      %s17 = sshll.u32 %s0, 4
      %s18 = int_to_ptr.hbm [resolvable:$true] %s17
      %s19 = sshll.u32 [#allocation2], 4
      %s20 = int_to_ptr.vmem [resolvable:$true] %s19
      %22 = dma.hbm_to_vmem [thread:$0]  %s18, 128, %s20, [#allocation3]
    $region5: #{tpu_custom_call.1} parent=1 // pred_fallthru
      _
    // Predicated region
    $region6: #{tpu_custom_call.1} parent=1 // pred_check
      _
    $region7: #{tpu_custom_call.1} parent=1 // pred_check_branch
      %24 = sbr.rel (0) target = $region9
    $region8: #{tpu_custom_call.1} parent=1 // pred_region
      _
    $region9: #{tpu_custom_call.1} parent=1 // pred_fallthru
      _
    // Predicated region
    $region10: #{tpu_custom_call.1} parent=1 // pred_check
      _
    $region11: #{tpu_custom_call.1} parent=1 // pred_check_branch
      %26 = sbr.rel (0) target = $region13
    $region12: #{tpu_custom_call.1} parent=1 // pred_region
      _
    $region13: #{tpu_custom_call.1} parent=1 // pred_fallthru
      _
    // Predicated region
    $region14: #{tpu_custom_call.1} parent=1 // pred_check
      _
    $region15: #{tpu_custom_call.1} parent=1 // pred_check_branch
      %28 = sbr.rel (0) target = $region17
    $region16: #{tpu_custom_call.1} parent=1 // pred_region
      %30 = vsyncadd [#allocation6], 0
      %s32 = sshll.u32 %s3, 4
      %s33 = int_to_ptr.hbm [resolvable:$true] %s32
      %s34 = sshll.u32 [#allocation5], 4
      %s35 = int_to_ptr.vmem [resolvable:$true] %s34
      %37 = dma.hbm_to_vmem [thread:$0]  %s33, 64, %s35, [#allocation6]
    $region17: #{tpu_custom_call.1} parent=1 // pred_fallthru
      _
    // Predicated region
    $region18: #{tpu_custom_call.1} parent=1 // pred_check
      _
    $region19: #{tpu_custom_call.1} parent=1 // pred_check_branch
      %39 = sbr.rel (0) target = $region21
    $region20: #{tpu_custom_call.1} parent=1 // pred_region
      %41 = dma.done [#allocation3], 128
    $region21: #{tpu_custom_call.1} parent=1 // pred_fallthru
      _
    // Predicated region
    $region22: #{tpu_custom_call.1} parent=1 // pred_check
      _
    $region23: #{tpu_custom_call.1} parent=1 // pred_check_branch
      %43 = sbr.rel (0) target = $region25
    $region24: #{tpu_custom_call.1} parent=1 // pred_region
      %45 = dma.done [#allocation6], 64
    $region25: #{tpu_custom_call.1} parent=1 // pred_fallthru
      _
    %v46 = vld [vmem:[#allocation2] sm:$0xff]
    %v47 = vld [vmem:[%s1] sm:$0xff]
    %v48 = vld [vmem:[%s1 + $0x8] sm:$0x1]
    %v49 = vld [vmem:[%s2] sm:$0xff]
    %v50 = vld [vmem:[%s2 + $0x8] sm:$0x1]
    %52 = vset.pattern.permute.xlu0 0
    %53 = vperm.xlu0 %52, %v49
    %v54 = vpop.permute.xlu0 %53
    %57 = vset.pattern.permute.xlu0 0
    %58 = vperm.xlu0 %57, %v50
    %v59 = vpop.permute.xlu0 %58
    %vm61 = vcmask 261120
    %v63 = vsel %vm61, %v47, 0
    %v66 = vsel %vm61, %v48, 0
    %v69 = vsel %vm61, %v46, 0
    %71 = vmatpush.xpose.msra.mxu0 0.0
    %72 = vmatpush.xpose.msra.mxu0 0.0
    %73 = vmatpush.xpose.msra.mxu0 0.0
    %74 = vmatpush.xpose.msra.mxu0 0.0
    %75 = vmatpush.xpose.msra.mxu0 0.0
    %76 = vmatpush.xpose.msra.mxu0 0.0
    %77 = vmatpush.xpose.msra.mxu0 0.0
    %78 = vmatpush.xpose.msra.mxu0 0.0
    %79 = vmatpush.xpose.msra.mxu0 0.0
    %80 = vmatpush.xpose.msra.mxu0 0.0
    %81 = vmatpush.xpose.msra.mxu0 0.0
    %82 = vmatpush.xpose.msra.mxu0 0.0
    %83 = vmatpush.xpose.msra.mxu0 0.0
    %84 = vmatpush.xpose.msra.mxu0 0.0
    %85 = vmatpush.xpose.msra.mxu0 0.0
    %86 = vmatpush.xpose.msra.mxu0 %v69
    %87 = vmatmul.f32.gmra.mxu0 %v63
    %v88 = vpop.f32.mrf.mxu0
    %v89 = vadd.f32 %v54, %v88
    %90 = vmatmul.f32.gmra.mxu0 %v66
    %v91 = vpop.f32.mrf.mxu0
    %v92 = vadd.f32 %v59, %v91
    %93 = vdwg.mxu0
    %vm94 = vcmask 64512
    %v95 = vsel %vm94, %v89, -inf
    %vm96 = vcmask 57344
    %v97 = vsel %vm96, %v92, -inf
    %v98 = vmax.f32 %v95, %v97
    %v99 = vrot.slane %v98, 4
    %v100 = vmax.f32 %v98, %v99
    %v101 = vrot.slane %v100, 2
    %v102 = vmax.f32 %v100, %v101
    %v103 = vrot.slane %v102, 1
    %v104 = vmax.f32 %v102, %v103
    %v105 = vsub.f32 %v89, %v104
    %v106 = vsub.f32 %v92, %v104
    %v107 = vmul.f32 %v105, 1.442695
    %v108 = vpow.pop %v107
    %v109 = vmul.f32 %v106, 1.442695
    %v110 = vpow.pop %v109
    %v111 = vsel %vm94, %v108, 0.0
    %v112 = vsel %vm96, %v110, 0.0
    %v113 = vadd.f32 %v111, %v112
    %v114 = vrot.slane %v113, 4
    %v115 = vadd.f32 %v113, %v114
    %v116 = vrot.slane %v115, 2
    %v117 = vadd.f32 %v115, %v116
    %v118 = vrot.slane %v117, 1
    %v119 = vadd.f32 %v117, %v118
    %v120 = vld [vmem:[#allocation5] sm:$0xf]
    %vm121 = vcmask 72704
    %v123 = vsel %vm121, %v120, 0
    %vm125 = vcmask 1040384
    %v127 = vsel %vm125, %v110, 0
    %129 = vmatpush.msra.mxu0 0.0
    %130 = vmatpush.msra.mxu0 0.0
    %131 = vmatpush.msra.mxu0 0.0
    %132 = vmatpush.msra.mxu0 0.0
    %133 = vmatpush.msra.mxu0 0.0
    %134 = vmatpush.msra.mxu0 0.0
    %135 = vmatpush.msra.mxu0 0.0
    %136 = vmatpush.msra.mxu0 0.0
    %137 = vmatpush.msra.mxu0 0.0
    %138 = vmatpush.msra.mxu0 0.0
    %139 = vmatpush.msra.mxu0 0.0
    %140 = vmatpush.msra.mxu0 0.0
    %141 = vmatpush.msra.mxu0 0.0
    %142 = vmatpush.msra.mxu0 0.0
    %143 = vmatpush.msra.mxu0 %v127
    %144 = vmatpush.msra.mxu0 %v108
    %145 = vmatmul.f32.gmra.mxu0 %v123
    %v146 = vpop.f32.mrf.mxu0
    %v147 = vadd.f32 0.0, %v146
    %148 = vdwg.mxu0
    %v149 = vrcp.pop %v119
    %v150 = vmul.f32 %v119, %v149
    %v151 = vsub.f32 1.0, %v150
    %v152 = vmul.f32 %v149, %v151
    %v153 = vadd.f32 %v149, %v152
    %vm154 = vweird.f32 %v119
    %vm155 = vweird.f32 %v149
    %vm156 = vmor %vm154, %vm155
    %v157 = vsel %vm156, %v149, %v153
    %v158 = vand.u32 2147483647, %v119
    %vm159 = vcmp.eq.f32.partialorder %v158, 8.507059e+37
    %v160 = vand.u32 %v119, 2147483648
    %v161 = vor.u32 1.1754944e-38, %v160
    %v162 = vsel %vm159, %v161, %v157
    %v163 = vmul.f32 %v147, %v162
    %vm164 = vcmask 60416
    %165 = vst.msk [vmem:[#allocation7] sm:$0xf] %vm164, %v163
    // Predicated region
    $region26: #{tpu_custom_call.1} parent=1 // pred_check
      _
    $region27: #{tpu_custom_call.1} parent=1 // pred_check_branch
      %167 = sbr.rel (0) target = $region29
    $region28: #{tpu_custom_call.1} parent=1 // pred_region
      %169 = vsyncadd [#allocation4], 0
      %s171 = sshll.u32 [#allocation7], 4
      %s172 = int_to_ptr.vmem [resolvable:$true] %s171
      %s173 = sshll.u32 %s4, 4
      %s174 = int_to_ptr.hbm [resolvable:$true] %s173
      %176 = dma.vmem_to_hbm [thread:$0]  %s172, 64, %s174, [#allocation4]
    $region29: #{tpu_custom_call.1} parent=1 // pred_fallthru
      _
    // Predicated region
    $region30: #{tpu_custom_call.1} parent=1 // pred_check
      _
    $region31: #{tpu_custom_call.1} parent=1 // pred_check_branch
      %178 = sbr.rel (0) target = $region33
    $region32: #{tpu_custom_call.1} parent=1 // pred_region
      %180 = dma.done [#allocation4], 64
    $region33: #{tpu_custom_call.1} parent=1 // pred_fallthru
      _
    %181 = vsyncpa [#allocation3], 1
    %182 = vsyncpa [#allocation6], 1
    %183 = vsyncpa [#allocation4], 1

</llo_original>
